<compile_context>
chip_gen: v7x
topology: tpu7x:2x2x1
jax: 0.10.0
libtpu: 0.0.40
codegen_flags: <defaults>
</compile_context>

<pallas_src>
import jax
import jax.numpy as jnp
import numpy as np
from jax.experimental import pallas as pl
from jax.experimental.pallas import tpu as pltpu

EPS = 1e-5


def _make_kernel(N, H, W, C):
    WC = W * C
    R = N * H
    inv_count = 1.0 / float(N * H * W)
    log2_w = W.bit_length() - 1          # W asserted to be a power of two

    def conv3x3(window, bd_ref):
        # window(i) -> (R, WC) f32 rows shifted by ky = i - 1 (zero rows at the
        # H borders).  Each ky tap is ONE accumulating matmul against a
        # block-tridiagonal band matrix carrying all three kx taps (W-boundary
        # padding folded in).  Operands cast to bf16; accumulation in f32.
        acc = jnp.zeros((R, WC), jnp.float32)
        for i in range(3):
            lhs = window(i).astype(jnp.bfloat16)
            acc = acc + jnp.dot(lhs, bd_ref[i],
                                preferred_element_type=jnp.float32)
        return acc

    def reduce_bcast(v):
        # v: (1, WC).  Sum the W lane-groups of C channels and broadcast the
        # per-channel totals back to every lane with log2(W) lane rolls
        # (XLU slot; replaces the old (1,WC)@(WC,WC) reduce/broadcast matmul).
        for k in range(log2_w):
            v = v + pltpu.roll(v, C * (1 << k), axis=1)   # positive shifts only
        return v

    def bn_scale_bias(z, g, b):
        # Training-mode batch-norm folded to a per-lane scale/bias:
        #   y = z * scale + bias,  scale = gamma * rsqrt(var + eps),
        #                          bias  = beta - mean * scale.
        # Two-pass (centered) variance avoids catastrophic cancellation.
        mean = reduce_bcast(jnp.sum(z, axis=0, keepdims=True)) * inv_count
        zc = z - mean
        var = reduce_bcast(jnp.sum(zc * zc, axis=0, keepdims=True)) * inv_count
        scale = g * jax.lax.rsqrt(var + EPS)
        bias = b - mean * scale
        return scale, bias

    def kernel(xp_ref, bd1_ref, g1_ref, b1_ref, bd2_hbm_ref, g2_ref, b2_ref,
               o_ref, ypad_ref, bd2_ref, dma_sem):
        # xp_ref     : (N, H+2, WC) f32 input, one zero row above/below each image
        # bd1_ref    : (3, WC, WC)  bf16 band taps for conv1 (VMEM, auto-DMA'd)
        # bd2_hbm_ref: (3, WC, WC)  bf16 band taps for conv2 (HBM, manual DMA)
        # g*/b*      : (1, WC)      gamma / beta tiled across the W groups
        # o_ref      : (N, H, WC)   output
        # ypad_ref   : (N, H+2, WC) f32 scratch (row-padded intermediate)
        # bd2_ref    : (3, WC, WC)  bf16 VMEM landing buffer for bd2
        # dma_sem    : DMA semaphore

        # Overlap the conv2 weight fetch with conv1 / bn1 compute.
        bd2_cp = pltpu.make_async_copy(bd2_hbm_ref, bd2_ref, dma_sem)
        bd2_cp.start()

        xp = xp_ref[...]

        # ---- conv1 (3 banded MXU matmuls) ----
        z1 = conv3x3(lambda i: xp[:, i:i + H, :].reshape(R, WC), bd1_ref)

        # ---- bn1 + relu (single FMA pass) ----
        sc1, bi1 = bn_scale_bias(z1, g1_ref[...], b1_ref[...])
        h1 = jnp.maximum(z1 * sc1 + bi1, 0.0)

        # Row-pad the intermediate: zero only the two border rows per image,
        # store the interior once (lane-dense).
        ypad_ref[:, 0:1, :] = jnp.zeros((N, 1, WC), jnp.float32)
        ypad_ref[:, H + 1:H + 2, :] = jnp.zeros((N, 1, WC), jnp.float32)
        ypad_ref[:, 1:H + 1, :] = h1.reshape(N, H, WC)

        # ---- conv2 (weights arrived via the overlapped DMA) ----
        bd2_cp.wait()
        yp = ypad_ref[...]
        z2 = conv3x3(lambda i: yp[:, i:i + H, :].reshape(R, WC), bd2_ref)

        # ---- bn2 + residual add + relu, one fused elementwise pass ----
        sc2, bi2 = bn_scale_bias(z2, g2_ref[...], b2_ref[...])
        identity = xp[:, 1:H + 1, :].reshape(R, WC)
        out = jnp.maximum(z2 * sc2 + bi2 + identity, 0.0)
        o_ref[...] = out.reshape(N, H, WC)

    return kernel


def _band_taps(w_oihw, W):
    """PyTorch (C_out, C_in, 3, 3) conv weight -> (3, W*C, W*C) bf16 band
    (block-tridiagonal) matrices, one per ky.  The three kx taps live on the
    block diagonals; omitted boundary blocks implement the conv's zero padding
    along W, so no in-kernel masking or lane rolls are needed."""
    C = w_oihw.shape[1]
    # (O, I, kh, kw) -> (kh, kw, C_in, C_out)
    taps = jnp.transpose(w_oihw.astype(jnp.float32), (2, 3, 1, 0))
    bands = []
    for ky in range(3):
        m = jnp.zeros((W * C, W * C), jnp.float32)
        for kx in range(3):
            # Block at (w_in, w_out) is taps[ky, kx] iff w_in == w_out + kx - 1.
            shift = jnp.eye(W, k=1 - kx, dtype=jnp.float32)
            m = m + jnp.kron(shift, taps[ky, kx])
        bands.append(m)
    return jnp.stack(bands).astype(jnp.bfloat16)


def resblock_forward(x_nchw, w1, g1, b1, w2, g2, b2):
    """x_nchw: (N, C, H, W) f32.  w1/w2: (C, C, 3, 3) PyTorch OIHW layout."""
    x = jnp.transpose(x_nchw, (0, 2, 3, 1)).astype(jnp.float32)     # NHWC
    N, H, W, C = x.shape
    WC = W * C
    assert WC == 128 and (W & (W - 1)) == 0, \
        "toy-shape kernel expects W*C == 128 and W a power of two"

    # Lane-dense layout (N, H, W*C); only the H axis needs an explicit zero pad
    # (the W-boundary padding lives in the band weights).
    xp = jnp.pad(x.reshape(N, H, WC), ((0, 0), (1, 1), (0, 0)))

    bd1 = _band_taps(w1, W)
    bd2 = _band_taps(w2, W)

    def tile_vec(v):
        return jnp.tile(v.astype(jnp.float32).reshape(C), W).reshape(1, WC)

    vmem = pl.BlockSpec(memory_space=pltpu.MemorySpace.VMEM)
    out = pl.pallas_call(
        _make_kernel(N, H, W, C),
        out_shape=jax.ShapeDtypeStruct((N, H, WC), jnp.float32),
        in_specs=[vmem,                                   # xp
                  vmem, vmem, vmem,                       # bd1, gamma1, beta1
                  pl.BlockSpec(memory_space=pl.ANY),      # bd2 (manual DMA)
                  vmem, vmem],                            # gamma2, beta2
        out_specs=vmem,
        scratch_shapes=[pltpu.VMEM((N, H + 2, WC), jnp.float32),    # padded h1
                        pltpu.VMEM((3, WC, WC), jnp.bfloat16),      # bd2 landing
                        pltpu.SemaphoreType.DMA(())],
        compiler_params=pltpu.CompilerParams(vmem_limit_bytes=32 * 1024 * 1024),
    )(xp, bd1, tile_vec(g1), tile_vec(b1), bd2, tile_vec(g2), tile_vec(b2))

    return jnp.transpose(out.reshape(N, H, W, C), (0, 3, 1, 2))      # NCHW


def _reference(x, w1, g1, b1, w2, g2, b2):
    def conv(z, w):
        return jax.lax.conv_general_dilated(
            z, w, (1, 1), ((1, 1), (1, 1)),
            dimension_numbers=("NCHW", "OIHW", "NCHW"))

    def bn(z, g, b):
        mean = jnp.mean(z, axis=(0, 2, 3), keepdims=True)
        var = jnp.mean((z - mean) ** 2, axis=(0, 2, 3), keepdims=True)
        return (z - mean) * jax.lax.rsqrt(var + EPS) * g.reshape(1, -1, 1, 1) \
            + b.reshape(1, -1, 1, 1)

    h = jax.nn.relu(bn(conv(x, w1), g1, b1))
    h = bn(conv(h, w2), g2, b2) + x
    return jax.nn.relu(h)


if __name__ == "__main__":
    # ResBlock(in_channels=C, out_channels=C); residual add requires C_in == C_out.
    N, C, H, W = 2, 8, 16, 16          # W * C = 128 -> lane axis exactly one vreg wide
    key = jax.random.PRNGKey(0)
    kx_, kw1, kw2, kg1, kb1, kg2, kb2 = jax.random.split(key, 7)

    x = jax.random.normal(kx_, (N, C, H, W), jnp.float32)
    fan_in = C * 3 * 3
    w1 = jax.random.normal(kw1, (C, C, 3, 3), jnp.float32) / np.sqrt(fan_in)
    w2 = jax.random.normal(kw2, (C, C, 3, 3), jnp.float32) / np.sqrt(fan_in)
    g1 = 1.0 + 0.1 * jax.random.normal(kg1, (C,), jnp.float32)
    b1 = 0.1 * jax.random.normal(kb1, (C,), jnp.float32)
    g2 = 1.0 + 0.1 * jax.random.normal(kg2, (C,), jnp.float32)
    b2 = 0.1 * jax.random.normal(kb2, (C,), jnp.float32)

    out = jax.block_until_ready(resblock_forward(x, w1, g1, b1, w2, g2, b2))
    ref = jax.block_until_ready(_reference(x, w1, g1, b1, w2, g2, b2))

    assert out.shape == (N, C, H, W)
    err = float(np.max(np.abs(np.asarray(out) - np.asarray(ref))))
    assert np.allclose(np.asarray(out), np.asarray(ref), atol=2e-2, rtol=2e-2), \
        f"max abs diff {err}"
    print("KERNEL_OK")
</pallas_src>

<mosaic_0001>
module attributes {stable_mosaic.version = 11 : i64} {
  func.func @kernel(%arg0: memref<2x18x128xf32, #tpu.memory_space<vmem>>, %arg1: memref<3x128x128xbf16, #tpu.memory_space<vmem>>, %arg2: memref<1x128xf32, #tpu.memory_space<vmem>>, %arg3: memref<1x128xf32, #tpu.memory_space<vmem>>, %arg4: memref<3x128x128xbf16, #tpu.memory_space<any>>, %arg5: memref<1x128xf32, #tpu.memory_space<vmem>>, %arg6: memref<1x128xf32, #tpu.memory_space<vmem>>, %arg7: memref<2x16x128xf32, #tpu.memory_space<vmem>>, %arg8: memref<2x18x128xf32, #tpu.memory_space<vmem>>, %arg9: memref<3x128x128xbf16, #tpu.memory_space<vmem>>, %arg10: memref<!tpu.dma_semaphore, #tpu.memory_space<semaphore_mem>>) attributes {dimension_semantics = [], scalar_prefetch = 0 : i64, scratch_operands = 3 : i64, tpu.core_type = #tpu.core_type<tc>} {
    tpu.enqueue_dma source(%arg4 : memref<3x128x128xbf16, #tpu.memory_space<any>>) target(%arg9 : memref<3x128x128xbf16, #tpu.memory_space<vmem>>) target_semaphore(%arg10 : memref<!tpu.dma_semaphore, #tpu.memory_space<semaphore_mem>>)
    %c0 = arith.constant 0 : index
    %c0_0 = arith.constant 0 : index
    %c0_1 = arith.constant 0 : index
    %0 = vector.load %arg0[%c0, %c0_0, %c0_1] : memref<2x18x128xf32, #tpu.memory_space<vmem>>, vector<2x18x128xf32>
    %cst = arith.constant 0.000000e+00 : f32
    %1 = vector.broadcast %cst : f32 to vector<32x128xf32>
    %2 = vector.extract_strided_slice %0 {offsets = [0, 0, 0], sizes = [2, 16, 128], strides = [1, 1, 1]} : vector<2x18x128xf32> to vector<2x16x128xf32>
    %3 = vector.shape_cast %2 : vector<2x16x128xf32> to vector<32x128xf32>
    %4 = arith.truncf %3 : vector<32x128xf32> to vector<32x128xbf16>
    %c0_2 = arith.constant 0 : index
    %c0_3 = arith.constant 0 : index
    %c0_4 = arith.constant 0 : index
    %5 = vector.load %arg1[%c0_2, %c0_3, %c0_4] : memref<3x128x128xbf16, #tpu.memory_space<vmem>>, vector<1x128x128xbf16>
    %6 = vector.shape_cast %5 : vector<1x128x128xbf16> to vector<128x128xbf16>
    %cst_5 = arith.constant dense<0.000000e+00> : vector<32x128xf32>
    %7 = tpu.matmul %4, %6, %cst_5 {dimension_numbers = #tpu.dot_dimension_numbers<[1], [0], [0], [1], [0, 0, 1, 1], [], []>} : vector<32x128xbf16>, vector<128x128xbf16>, vector<32x128xf32> -> vector<32x128xf32>
    %8 = arith.addf %1, %7 : vector<32x128xf32>
    %9 = vector.extract_strided_slice %0 {offsets = [0, 1, 0], sizes = [2, 16, 128], strides = [1, 1, 1]} : vector<2x18x128xf32> to vector<2x16x128xf32>
    %10 = vector.shape_cast %9 : vector<2x16x128xf32> to vector<32x128xf32>
    %11 = arith.truncf %10 : vector<32x128xf32> to vector<32x128xbf16>
    %c1 = arith.constant 1 : index
    %c0_6 = arith.constant 0 : index
    %c0_7 = arith.constant 0 : index
    %12 = vector.load %arg1[%c1, %c0_6, %c0_7] : memref<3x128x128xbf16, #tpu.memory_space<vmem>>, vector<1x128x128xbf16>
    %13 = vector.shape_cast %12 : vector<1x128x128xbf16> to vector<128x128xbf16>
    %cst_8 = arith.constant dense<0.000000e+00> : vector<32x128xf32>
    %14 = tpu.matmul %11, %13, %cst_8 {dimension_numbers = #tpu.dot_dimension_numbers<[1], [0], [0], [1], [0, 0, 1, 1], [], []>} : vector<32x128xbf16>, vector<128x128xbf16>, vector<32x128xf32> -> vector<32x128xf32>
    %15 = arith.addf %8, %14 : vector<32x128xf32>
    %16 = vector.extract_strided_slice %0 {offsets = [0, 2, 0], sizes = [2, 16, 128], strides = [1, 1, 1]} : vector<2x18x128xf32> to vector<2x16x128xf32>
    %17 = vector.shape_cast %16 : vector<2x16x128xf32> to vector<32x128xf32>
    %18 = arith.truncf %17 : vector<32x128xf32> to vector<32x128xbf16>
    %c2 = arith.constant 2 : index
    %c0_9 = arith.constant 0 : index
    %c0_10 = arith.constant 0 : index
    %19 = vector.load %arg1[%c2, %c0_9, %c0_10] : memref<3x128x128xbf16, #tpu.memory_space<vmem>>, vector<1x128x128xbf16>
    %20 = vector.shape_cast %19 : vector<1x128x128xbf16> to vector<128x128xbf16>
    %cst_11 = arith.constant dense<0.000000e+00> : vector<32x128xf32>
    %21 = tpu.matmul %18, %20, %cst_11 {dimension_numbers = #tpu.dot_dimension_numbers<[1], [0], [0], [1], [0, 0, 1, 1], [], []>} : vector<32x128xbf16>, vector<128x128xbf16>, vector<32x128xf32> -> vector<32x128xf32>
    %22 = arith.addf %15, %21 : vector<32x128xf32>
    %c0_12 = arith.constant 0 : index
    %c0_13 = arith.constant 0 : index
    %23 = vector.load %arg2[%c0_12, %c0_13] : memref<1x128xf32, #tpu.memory_space<vmem>>, vector<1x128xf32>
    %c0_14 = arith.constant 0 : index
    %c0_15 = arith.constant 0 : index
    %24 = vector.load %arg3[%c0_14, %c0_15] : memref<1x128xf32, #tpu.memory_space<vmem>>, vector<1x128xf32>
    %cst_16 = arith.constant dense<0.000000e+00> : vector<128xf32>
    %25 = vector.multi_reduction <add>, %22, %cst_16 [0] : vector<32x128xf32> to vector<128xf32>
    %26 = vector.shape_cast %25 : vector<128xf32> to vector<1x128xf32>
    %c8_i32 = arith.constant 8 : i32
    %27 = tpu.dynamic_rotate %26 by %c8_i32 dim 1 : vector<1x128xf32>, i32 -> vector<1x128xf32>
    %28 = arith.addf %26, %27 : vector<1x128xf32>
    %c16_i32 = arith.constant 16 : i32
    %29 = tpu.dynamic_rotate %28 by %c16_i32 dim 1 : vector<1x128xf32>, i32 -> vector<1x128xf32>
    %30 = arith.addf %28, %29 : vector<1x128xf32>
    %c32_i32 = arith.constant 32 : i32
    %31 = tpu.dynamic_rotate %30 by %c32_i32 dim 1 : vector<1x128xf32>, i32 -> vector<1x128xf32>
    %32 = arith.addf %30, %31 : vector<1x128xf32>
    %c64_i32 = arith.constant 64 : i32
    %33 = tpu.dynamic_rotate %32 by %c64_i32 dim 1 : vector<1x128xf32>, i32 -> vector<1x128xf32>
    %34 = arith.addf %32, %33 : vector<1x128xf32>
    %cst_17 = arith.constant 0.001953125 : f32
    %35 = vector.broadcast %cst_17 : f32 to vector<1x128xf32>
    %36 = arith.mulf %34, %35 : vector<1x128xf32>
    %37 = vector.broadcast %36 : vector<1x128xf32> to vector<32x128xf32>
    %38 = arith.subf %22, %37 : vector<32x128xf32>
    %39 = arith.mulf %38, %38 : vector<32x128xf32>
    %cst_18 = arith.constant dense<0.000000e+00> : vector<128xf32>
    %40 = vector.multi_reduction <add>, %39, %cst_18 [0] : vector<32x128xf32> to vector<128xf32>
    %41 = vector.shape_cast %40 : vector<128xf32> to vector<1x128xf32>
    %c8_i32_19 = arith.constant 8 : i32
    %42 = tpu.dynamic_rotate %41 by %c8_i32_19 dim 1 : vector<1x128xf32>, i32 -> vector<1x128xf32>
    %43 = arith.addf %41, %42 : vector<1x128xf32>
    %c16_i32_20 = arith.constant 16 : i32
    %44 = tpu.dynamic_rotate %43 by %c16_i32_20 dim 1 : vector<1x128xf32>, i32 -> vector<1x128xf32>
    %45 = arith.addf %43, %44 : vector<1x128xf32>
    %c32_i32_21 = arith.constant 32 : i32
    %46 = tpu.dynamic_rotate %45 by %c32_i32_21 dim 1 : vector<1x128xf32>, i32 -> vector<1x128xf32>
    %47 = arith.addf %45, %46 : vector<1x128xf32>
    %c64_i32_22 = arith.constant 64 : i32
    %48 = tpu.dynamic_rotate %47 by %c64_i32_22 dim 1 : vector<1x128xf32>, i32 -> vector<1x128xf32>
    %49 = arith.addf %47, %48 : vector<1x128xf32>
    %cst_23 = arith.constant 0.001953125 : f32
    %50 = vector.broadcast %cst_23 : f32 to vector<1x128xf32>
    %51 = arith.mulf %49, %50 : vector<1x128xf32>
    %cst_24 = arith.constant 9.99999974E-6 : f32
    %52 = vector.broadcast %cst_24 : f32 to vector<1x128xf32>
    %53 = arith.addf %51, %52 : vector<1x128xf32>
    %54 = math.rsqrt %53 : vector<1x128xf32>
    %55 = arith.mulf %23, %54 : vector<1x128xf32>
    %56 = arith.mulf %36, %55 : vector<1x128xf32>
    %57 = arith.subf %24, %56 : vector<1x128xf32>
    %58 = vector.broadcast %55 : vector<1x128xf32> to vector<32x128xf32>
    %59 = arith.mulf %22, %58 : vector<32x128xf32>
    %60 = vector.broadcast %57 : vector<1x128xf32> to vector<32x128xf32>
    %61 = arith.addf %59, %60 : vector<32x128xf32>
    %cst_25 = arith.constant 0.000000e+00 : f32
    %62 = vector.broadcast %cst_25 : f32 to vector<32x128xf32>
    %63 = arith.maximumf %61, %62 : vector<32x128xf32>
    %cst_26 = arith.constant 0.000000e+00 : f32
    %64 = vector.broadcast %cst_26 : f32 to vector<2x1x128xf32>
    %c0_27 = arith.constant 0 : index
    %c0_28 = arith.constant 0 : index
    %c0_29 = arith.constant 0 : index
    %65 = vector.load %arg8[%c0_27, %c0_28, %c0_29] : memref<2x18x128xf32, #tpu.memory_space<vmem>>, vector<2x1x128xf32>
    tpu.vector_store %arg8[%c0_27, %c0_28, %c0_29], %64 {strides = array<i32>} : memref<2x18x128xf32, #tpu.memory_space<vmem>>, vector<2x1x128xf32>,
    %cst_30 = arith.constant 0.000000e+00 : f32
    %66 = vector.broadcast %cst_30 : f32 to vector<2x1x128xf32>
    %c0_31 = arith.constant 0 : index
    %c17 = arith.constant 17 : index
    %c0_32 = arith.constant 0 : index
    %67 = vector.load %arg8[%c0_31, %c17, %c0_32] : memref<2x18x128xf32, #tpu.memory_space<vmem>>, vector<2x1x128xf32>
    tpu.vector_store %arg8[%c0_31, %c17, %c0_32], %66 {strides = array<i32>} : memref<2x18x128xf32, #tpu.memory_space<vmem>>, vector<2x1x128xf32>,
    %68 = vector.shape_cast %63 : vector<32x128xf32> to vector<2x16x128xf32>
    %c0_33 = arith.constant 0 : index
    %c1_34 = arith.constant 1 : index
    %c0_35 = arith.constant 0 : index
    %69 = vector.load %arg8[%c0_33, %c1_34, %c0_35] : memref<2x18x128xf32, #tpu.memory_space<vmem>>, vector<2x16x128xf32>
    tpu.vector_store %arg8[%c0_33, %c1_34, %c0_35], %68 {strides = array<i32>} : memref<2x18x128xf32, #tpu.memory_space<vmem>>, vector<2x16x128xf32>,
    tpu.wait_dma2 semaphore(%arg10 : memref<!tpu.dma_semaphore, #tpu.memory_space<semaphore_mem>>) src(%arg4 : memref<3x128x128xbf16, #tpu.memory_space<any>>) dst(%arg9 : memref<3x128x128xbf16, #tpu.memory_space<vmem>>)
    %c0_36 = arith.constant 0 : index
    %c0_37 = arith.constant 0 : index
    %c0_38 = arith.constant 0 : index
    %70 = vector.load %arg8[%c0_36, %c0_37, %c0_38] : memref<2x18x128xf32, #tpu.memory_space<vmem>>, vector<2x18x128xf32>
    %cst_39 = arith.constant 0.000000e+00 : f32
    %71 = vector.broadcast %cst_39 : f32 to vector<32x128xf32>
    %72 = vector.extract_strided_slice %70 {offsets = [0, 0, 0], sizes = [2, 16, 128], strides = [1, 1, 1]} : vector<2x18x128xf32> to vector<2x16x128xf32>
    %73 = vector.shape_cast %72 : vector<2x16x128xf32> to vector<32x128xf32>
    %74 = arith.truncf %73 : vector<32x128xf32> to vector<32x128xbf16>
    %c0_40 = arith.constant 0 : index
    %c0_41 = arith.constant 0 : index
    %c0_42 = arith.constant 0 : index
    %75 = vector.load %arg9[%c0_40, %c0_41, %c0_42] : memref<3x128x128xbf16, #tpu.memory_space<vmem>>, vector<1x128x128xbf16>
    %76 = vector.shape_cast %75 : vector<1x128x128xbf16> to vector<128x128xbf16>
    %cst_43 = arith.constant dense<0.000000e+00> : vector<32x128xf32>
    %77 = tpu.matmul %74, %76, %cst_43 {dimension_numbers = #tpu.dot_dimension_numbers<[1], [0], [0], [1], [0, 0, 1, 1], [], []>} : vector<32x128xbf16>, vector<128x128xbf16>, vector<32x128xf32> -> vector<32x128xf32>
    %78 = arith.addf %71, %77 : vector<32x128xf32>
    %79 = vector.extract_strided_slice %70 {offsets = [0, 1, 0], sizes = [2, 16, 128], strides = [1, 1, 1]} : vector<2x18x128xf32> to vector<2x16x128xf32>
    %80 = vector.shape_cast %79 : vector<2x16x128xf32> to vector<32x128xf32>
    %81 = arith.truncf %80 : vector<32x128xf32> to vector<32x128xbf16>
    %c1_44 = arith.constant 1 : index
    %c0_45 = arith.constant 0 : index
    %c0_46 = arith.constant 0 : index
    %82 = vector.load %arg9[%c1_44, %c0_45, %c0_46] : memref<3x128x128xbf16, #tpu.memory_space<vmem>>, vector<1x128x128xbf16>
    %83 = vector.shape_cast %82 : vector<1x128x128xbf16> to vector<128x128xbf16>
    %cst_47 = arith.constant dense<0.000000e+00> : vector<32x128xf32>
    %84 = tpu.matmul %81, %83, %cst_47 {dimension_numbers = #tpu.dot_dimension_numbers<[1], [0], [0], [1], [0, 0, 1, 1], [], []>} : vector<32x128xbf16>, vector<128x128xbf16>, vector<32x128xf32> -> vector<32x128xf32>
    %85 = arith.addf %78, %84 : vector<32x128xf32>
    %86 = vector.extract_strided_slice %70 {offsets = [0, 2, 0], sizes = [2, 16, 128], strides = [1, 1, 1]} : vector<2x18x128xf32> to vector<2x16x128xf32>
    %87 = vector.shape_cast %86 : vector<2x16x128xf32> to vector<32x128xf32>
    %88 = arith.truncf %87 : vector<32x128xf32> to vector<32x128xbf16>
    %c2_48 = arith.constant 2 : index
    %c0_49 = arith.constant 0 : index
    %c0_50 = arith.constant 0 : index
    %89 = vector.load %arg9[%c2_48, %c0_49, %c0_50] : memref<3x128x128xbf16, #tpu.memory_space<vmem>>, vector<1x128x128xbf16>
    %90 = vector.shape_cast %89 : vector<1x128x128xbf16> to vector<128x128xbf16>
    %cst_51 = arith.constant dense<0.000000e+00> : vector<32x128xf32>
    %91 = tpu.matmul %88, %90, %cst_51 {dimension_numbers = #tpu.dot_dimension_numbers<[1], [0], [0], [1], [0, 0, 1, 1], [], []>} : vector<32x128xbf16>, vector<128x128xbf16>, vector<32x128xf32> -> vector<32x128xf32>
    %92 = arith.addf %85, %91 : vector<32x128xf32>
    %c0_52 = arith.constant 0 : index
    %c0_53 = arith.constant 0 : index
    %93 = vector.load %arg5[%c0_52, %c0_53] : memref<1x128xf32, #tpu.memory_space<vmem>>, vector<1x128xf32>
    %c0_54 = arith.constant 0 : index
    %c0_55 = arith.constant 0 : index
    %94 = vector.load %arg6[%c0_54, %c0_55] : memref<1x128xf32, #tpu.memory_space<vmem>>, vector<1x128xf32>
    %cst_56 = arith.constant dense<0.000000e+00> : vector<128xf32>
    %95 = vector.multi_reduction <add>, %92, %cst_56 [0] : vector<32x128xf32> to vector<128xf32>
    %96 = vector.shape_cast %95 : vector<128xf32> to vector<1x128xf32>
    %c8_i32_57 = arith.constant 8 : i32
    %97 = tpu.dynamic_rotate %96 by %c8_i32_57 dim 1 : vector<1x128xf32>, i32 -> vector<1x128xf32>
    %98 = arith.addf %96, %97 : vector<1x128xf32>
    %c16_i32_58 = arith.constant 16 : i32
    %99 = tpu.dynamic_rotate %98 by %c16_i32_58 dim 1 : vector<1x128xf32>, i32 -> vector<1x128xf32>
    %100 = arith.addf %98, %99 : vector<1x128xf32>
    %c32_i32_59 = arith.constant 32 : i32
    %101 = tpu.dynamic_rotate %100 by %c32_i32_59 dim 1 : vector<1x128xf32>, i32 -> vector<1x128xf32>
    %102 = arith.addf %100, %101 : vector<1x128xf32>
    %c64_i32_60 = arith.constant 64 : i32
    %103 = tpu.dynamic_rotate %102 by %c64_i32_60 dim 1 : vector<1x128xf32>, i32 -> vector<1x128xf32>
    %104 = arith.addf %102, %103 : vector<1x128xf32>
    %cst_61 = arith.constant 0.001953125 : f32
    %105 = vector.broadcast %cst_61 : f32 to vector<1x128xf32>
    %106 = arith.mulf %104, %105 : vector<1x128xf32>
    %107 = vector.broadcast %106 : vector<1x128xf32> to vector<32x128xf32>
    %108 = arith.subf %92, %107 : vector<32x128xf32>
    %109 = arith.mulf %108, %108 : vector<32x128xf32>
    %cst_62 = arith.constant dense<0.000000e+00> : vector<128xf32>
    %110 = vector.multi_reduction <add>, %109, %cst_62 [0] : vector<32x128xf32> to vector<128xf32>
    %111 = vector.shape_cast %110 : vector<128xf32> to vector<1x128xf32>
    %c8_i32_63 = arith.constant 8 : i32
    %112 = tpu.dynamic_rotate %111 by %c8_i32_63 dim 1 : vector<1x128xf32>, i32 -> vector<1x128xf32>
    %113 = arith.addf %111, %112 : vector<1x128xf32>
    %c16_i32_64 = arith.constant 16 : i32
    %114 = tpu.dynamic_rotate %113 by %c16_i32_64 dim 1 : vector<1x128xf32>, i32 -> vector<1x128xf32>
    %115 = arith.addf %113, %114 : vector<1x128xf32>
    %c32_i32_65 = arith.constant 32 : i32
    %116 = tpu.dynamic_rotate %115 by %c32_i32_65 dim 1 : vector<1x128xf32>, i32 -> vector<1x128xf32>
    %117 = arith.addf %115, %116 : vector<1x128xf32>
    %c64_i32_66 = arith.constant 64 : i32
    %118 = tpu.dynamic_rotate %117 by %c64_i32_66 dim 1 : vector<1x128xf32>, i32 -> vector<1x128xf32>
    %119 = arith.addf %117, %118 : vector<1x128xf32>
    %cst_67 = arith.constant 0.001953125 : f32
    %120 = vector.broadcast %cst_67 : f32 to vector<1x128xf32>
    %121 = arith.mulf %119, %120 : vector<1x128xf32>
    %cst_68 = arith.constant 9.99999974E-6 : f32
    %122 = vector.broadcast %cst_68 : f32 to vector<1x128xf32>
    %123 = arith.addf %121, %122 : vector<1x128xf32>
    %124 = math.rsqrt %123 : vector<1x128xf32>
    %125 = arith.mulf %93, %124 : vector<1x128xf32>
    %126 = arith.mulf %106, %125 : vector<1x128xf32>
    %127 = arith.subf %94, %126 : vector<1x128xf32>
    %128 = vector.extract_strided_slice %0 {offsets = [0, 1, 0], sizes = [2, 16, 128], strides = [1, 1, 1]} : vector<2x18x128xf32> to vector<2x16x128xf32>
    %129 = vector.shape_cast %128 : vector<2x16x128xf32> to vector<32x128xf32>
    %130 = vector.broadcast %125 : vector<1x128xf32> to vector<32x128xf32>
    %131 = arith.mulf %92, %130 : vector<32x128xf32>
    %132 = vector.broadcast %127 : vector<1x128xf32> to vector<32x128xf32>
    %133 = arith.addf %131, %132 : vector<32x128xf32>
    %134 = arith.addf %133, %129 : vector<32x128xf32>
    %cst_69 = arith.constant 0.000000e+00 : f32
    %135 = vector.broadcast %cst_69 : f32 to vector<32x128xf32>
    %136 = arith.maximumf %134, %135 : vector<32x128xf32>
    %137 = vector.shape_cast %136 : vector<32x128xf32> to vector<2x16x128xf32>
    %c0_70 = arith.constant 0 : index
    %c0_71 = arith.constant 0 : index
    %c0_72 = arith.constant 0 : index
    %138 = vector.load %arg7[%c0_70, %c0_71, %c0_72] : memref<2x16x128xf32, #tpu.memory_space<vmem>>, vector<2x16x128xf32>
    tpu.vector_store %arg7[%c0_70, %c0_71, %c0_72], %137 {strides = array<i32>} : memref<2x16x128xf32, #tpu.memory_space<vmem>>, vector<2x16x128xf32>,
    return
  }
}

</mosaic_0001>

<llo_original>
// kernel: tpu_custom_call.1
$region0: #{tpu_custom_call.1}
  #allocation0 [shape = 'u32[]', space=smem, size = 0x4, offset = 0x4, fixed_abs, tag = 'smem constant byte address 0x4 - core index']
  #allocation1 [shape = 'u32[144,128]{1,0:T(1,128)}', space=vmem, size = 0x12000, scoped, tag = 'internal scratch']
  #allocation2 [shape = 'f32[2,18,128]{2,1,0:T(8,128)}', space=vmem, size = 0x6000, scoped, tag = 'scratch operand']
  #allocation3 [shape = 'bf16[3,128,128]{2,1,0:T(16,128)(2,1)}', space=vmem, size = 0x18000, scoped, tag = 'scratch operand']
  #allocation4 [shape = 's32[1]{0}', space=sflag, size = 0x4, scoped, tag = 'scratch operand']
  #allocation9 [shape = 's32[]', space=sflag, size = 0x4, offset = 0, fixed_abs, tag = 'sflag constant byte address 0x0 - dummy sync flag']
  #allocation10 [shape = 's32[]', space=sflag, size = 0x4, offset = 0, fixed_abs, tag = 'sflag constant byte address 0x0 - dummy sync flag']
  #allocation11 [shape = 'u32[]', space=smem, size = 0x4, offset = 0x44, fixed_abs, tag = 'smem constant byte address 0x44 - assertion arg 0']
  #allocation12 [shape = 'u32[]', space=smem, size = 0x4, offset = 0x48, fixed_abs, tag = 'smem constant byte address 0x48 - assertion arg 1']
  %s0 = inlined_call_operand.vmem [shape: f32[2,18,128], index: 0, kind: input, shape index: {}]
  %s1 = inlined_call_operand.hbm [shape: bf16[3,128,128], index: 1, kind: input, shape index: {}]
  %s2 = inlined_call_operand.vmem [shape: f32[1,128], index: 2, kind: input, shape index: {}]
  %s3 = inlined_call_operand.vmem [shape: f32[1,128], index: 3, kind: input, shape index: {}]
  %s4 = inlined_call_operand.hbm [shape: bf16[3,128,128], index: 4, kind: input, shape index: {}]
  %s5 = inlined_call_operand.vmem [shape: f32[1,128], index: 5, kind: input, shape index: {}]
  %s6 = inlined_call_operand.vmem [shape: f32[1,128], index: 6, kind: input, shape index: {}]
  %s7 = inlined_call_operand.hbm [shape: f32[2,16,128], index: 7, kind: output, shape index: {}]
  %s8 = sld [smem:[#allocation0]]
  $region42: #{tpu_custom_call.1} parent=0
    _
  %s10 = ssub.s32 1, %s8
  %s11 = scalar_select 0, %s10, %s8
  $region1: #{tpu_custom_call.1} parent=0
    #allocation5 [shape = 'u8[98304]{0}', space=vmem, size = 0x18000, scoped, tag = 'input window, operand 1, single buffered']
    #allocation6 [shape = 's32[1]{0}', space=sflag, size = 0x4, scoped, tag = 'scoped memory for tpu_custom_call.1']
    #allocation7 [shape = 's32[1]{0}', space=sflag, size = 0x4, scoped, tag = 'scoped memory for tpu_custom_call.1']
    #allocation8 [shape = 'u8[16384]{0}', space=vmem, size = 0x4000, scoped, tag = 'output window, operand 0, single buffered']
    %12 = vsyncpa [#allocation6], 0
    %13 = vsyncpa [#allocation7], 0
    // Predicated region
    $region2: #{tpu_custom_call.1} parent=1 // pred_check
      _
    $region3: #{tpu_custom_call.1} parent=1 // pred_check_branch
      %15 = sbr.rel (0) target = $region5
    $region4: #{tpu_custom_call.1} parent=1 // pred_region
      _
    $region5: #{tpu_custom_call.1} parent=1 // pred_fallthru
      _
    // Predicated region
    $region6: #{tpu_custom_call.1} parent=1 // pred_check
      _
    $region7: #{tpu_custom_call.1} parent=1 // pred_check_branch
      %17 = sbr.rel (0) target = $region9
    $region8: #{tpu_custom_call.1} parent=1 // pred_region
      %s19 = ssub.s32 3072, 3072
      %20 = vsyncadd [#allocation6], %s19
      %s21 = sshll.u32 [#allocation5], 4
      %s22 = int_to_ptr.vmem [resolvable:$true] %s21
      %27 = dma.hbm_to_vmem [thread:$0]  %s1, 3072, %s22, [#allocation6], 64, 64, 4
    $region9: #{tpu_custom_call.1} parent=1 // pred_fallthru
      _
    // Predicated region
    $region10: #{tpu_custom_call.1} parent=1 // pred_check
      _
    $region11: #{tpu_custom_call.1} parent=1 // pred_check_branch
      %29 = sbr.rel (0) target = $region13
    $region12: #{tpu_custom_call.1} parent=1 // pred_region
      _
    $region13: #{tpu_custom_call.1} parent=1 // pred_fallthru
      _
    // Predicated region
    $region14: #{tpu_custom_call.1} parent=1 // pred_check
      _
    $region15: #{tpu_custom_call.1} parent=1 // pred_check_branch
      %31 = sbr.rel (0) target = $region17
    $region16: #{tpu_custom_call.1} parent=1 // pred_region
      _
    $region17: #{tpu_custom_call.1} parent=1 // pred_fallthru
      _
    // Predicated region
    $region18: #{tpu_custom_call.1} parent=1 // pred_check
      _
    $region19: #{tpu_custom_call.1} parent=1 // pred_check_branch
      %33 = sbr.rel (0) target = $region21
    $region20: #{tpu_custom_call.1} parent=1 // pred_region
      _
    $region21: #{tpu_custom_call.1} parent=1 // pred_fallthru
      _
    // Predicated region
    $region22: #{tpu_custom_call.1} parent=1 // pred_check
      _
    $region23: #{tpu_custom_call.1} parent=1 // pred_check_branch
      %35 = sbr.rel (0) target = $region25
    $region24: #{tpu_custom_call.1} parent=1 // pred_region
      _
    $region25: #{tpu_custom_call.1} parent=1 // pred_fallthru
      _
    // Predicated region
    $region26: #{tpu_custom_call.1} parent=1 // pred_check
      _
    $region27: #{tpu_custom_call.1} parent=1 // pred_check_branch
      %37 = sbr.rel (0) target = $region29
    $region28: #{tpu_custom_call.1} parent=1 // pred_region
      %38 = dma.done [#allocation6], 3072
    $region29: #{tpu_custom_call.1} parent=1 // pred_fallthru
      _
    // Predicated region
    $region30: #{tpu_custom_call.1} parent=1 // pred_check
      _
    $region31: #{tpu_custom_call.1} parent=1 // pred_check_branch
      %41 = sbr.rel target = $region33
    $region32: #{tpu_custom_call.1} parent=1 // pred_region
      %42 = sst [smem:[#allocation11]] [#allocation10]
      %43 = sst [smem:[#allocation12]] [#allocation9]
    $region33: #{tpu_custom_call.1} parent=1 // pred_fallthru
      _
    %45 = shalt.err (0)
    %s47 = sshll.u32 [#allocation3], 4
    %s48 = int_to_ptr.vmem [resolvable:$true] %s47
    %50 = dma.hbm_to_vmem [thread:$0]  %s4, 3072, %s48, [#allocation4]
    %v51 = vld [vmem:[%s0] sm:$0xff]
    %v52 = vld [vmem:[%s0 + $0x8] sm:$0xff]
    %v53 = vld [vmem:[%s0 + $0x10] sm:$0x3]
    %v54 = vld [vmem:[%s0 + $0x18] sm:$0xff]
    %v55 = vld [vmem:[%s0 + $0x20] sm:$0xff]
    %v56 = vld [vmem:[%s0 + $0x28] sm:$0x3]
    %v57 = vpack.c.bf16 %v52, %v51
    %v58 = vpack.c.bf16 %v55, %v54
    %v59 = vld [vmem:[#allocation5] sm:$0xf]
    %v60 = vld [vmem:[#allocation5 + $0x4] sm:$0xf]
    %v61 = vld [vmem:[#allocation5 + $0x8] sm:$0xf]
    %v62 = vld [vmem:[#allocation5 + $0xc] sm:$0xf]
    %v63 = vld [vmem:[#allocation5 + $0x10] sm:$0xf]
    %v64 = vld [vmem:[#allocation5 + $0x14] sm:$0xf]
    %v65 = vld [vmem:[#allocation5 + $0x18] sm:$0xf]
    %v66 = vld [vmem:[#allocation5 + $0x1c] sm:$0xf]
    %v67 = vld [vmem:[#allocation5 + $0x20] sm:$0xf]
    %v68 = vld [vmem:[#allocation5 + $0x24] sm:$0xf]
    %v69 = vld [vmem:[#allocation5 + $0x28] sm:$0xf]
    %v70 = vld [vmem:[#allocation5 + $0x2c] sm:$0xf]
    %v71 = vld [vmem:[#allocation5 + $0x30] sm:$0xf]
    %v72 = vld [vmem:[#allocation5 + $0x34] sm:$0xf]
    %v73 = vld [vmem:[#allocation5 + $0x38] sm:$0xf]
    %v74 = vld [vmem:[#allocation5 + $0x3c] sm:$0xf]
    %vm81 = vcmask 1046528
    %v82 = vrot.slane %v51, 1
    %v83 = vrot.slane %v52, 1
    %v84 = vsel %vm81, %v82, %v83
    %v85 = vrot.slane %v53, 1
    %v86 = vsel %vm81, %v83, %v85
    %v87 = vrot.slane %v54, 1
    %v88 = vrot.slane %v55, 1
    %v89 = vsel %vm81, %v87, %v88
    %v90 = vrot.slane %v56, 1
    %v91 = vsel %vm81, %v88, %v90
    %v96 = vpack.c.bf16 %v86, %v84
    %v97 = vpack.c.bf16 %v91, %v89
    %s98 = scalar_lea.vmem [#allocation5], 64
    %v99 = vld [vmem:[%s98] sm:$0xf]
    %v100 = vld [vmem:[%s98 + $0x4] sm:$0xf]
    %v101 = vld [vmem:[%s98 + $0x8] sm:$0xf]
    %v102 = vld [vmem:[%s98 + $0xc] sm:$0xf]
    %v103 = vld [vmem:[%s98 + $0x10] sm:$0xf]
    %v104 = vld [vmem:[%s98 + $0x14] sm:$0xf]
    %v105 = vld [vmem:[%s98 + $0x18] sm:$0xf]
    %v106 = vld [vmem:[%s98 + $0x1c] sm:$0xf]
    %v107 = vld [vmem:[%s98 + $0x20] sm:$0xf]
    %v108 = vld [vmem:[%s98 + $0x24] sm:$0xf]
    %v109 = vld [vmem:[%s98 + $0x28] sm:$0xf]
    %v110 = vld [vmem:[%s98 + $0x2c] sm:$0xf]
    %v111 = vld [vmem:[%s98 + $0x30] sm:$0xf]
    %v112 = vld [vmem:[%s98 + $0x34] sm:$0xf]
    %v113 = vld [vmem:[%s98 + $0x38] sm:$0xf]
    %v114 = vld [vmem:[%s98 + $0x3c] sm:$0xf]
    %v131 = vunpack.c.l.b16 %v99
    %v132 = vunpack.c.l.b16 %v100
    %v133 = vunpack.c.l.b16 %v101
    %v134 = vunpack.c.l.b16 %v102
    %v135 = vunpack.c.l.b16 %v103
    %v136 = vunpack.c.l.b16 %v104
    %v137 = vunpack.c.l.b16 %v105
    %v138 = vunpack.c.l.b16 %v106
    %v139 = vunpack.c.l.b16 %v107
    %v140 = vunpack.c.l.b16 %v108
    %v141 = vunpack.c.l.b16 %v109
    %v142 = vunpack.c.l.b16 %v110
    %v143 = vunpack.c.l.b16 %v111
    %v144 = vunpack.c.l.b16 %v112
    %v145 = vunpack.c.l.b16 %v113
    %v146 = vunpack.c.l.b16 %v114
    %v147 = vpack.c.b16 %v132, %v131
    %v148 = vpack.c.b16 %v134, %v133
    %v149 = vpack.c.b16 %v136, %v135
    %v150 = vpack.c.b16 %v138, %v137
    %v151 = vpack.c.b16 %v140, %v139
    %v152 = vpack.c.b16 %v142, %v141
    %v153 = vpack.c.b16 %v144, %v143
    %v154 = vpack.c.b16 %v146, %v145
    %163 = vmatprep.subr.bf16.mxu0 0
    %164 = vmatpush1.bf16.msra.mxu0 %v147
    %165 = vmatprep.subr.bf16.mxu0 0
    %166 = vmatpush1.bf16.msra.mxu0 %v148
    %167 = vmatprep.subr.bf16.mxu0 0
    %168 = vmatpush1.bf16.msra.mxu0 %v149
    %169 = vmatprep.subr.bf16.mxu0 0
    %170 = vmatpush1.bf16.msra.mxu0 %v150
    %171 = vmatprep.subr.bf16.mxu0 0
    %172 = vmatpush1.bf16.msra.mxu0 %v151
    %173 = vmatprep.subr.bf16.mxu0 0
    %174 = vmatpush1.bf16.msra.mxu0 %v152
    %175 = vmatprep.subr.bf16.mxu0 0
    %176 = vmatpush1.bf16.msra.mxu0 %v153
    %177 = vmatprep.subr.bf16.mxu0 0
    %178 = vmatpush1.bf16.msra.mxu0 %v154
    %179 = vmatprep.subr.bf16.mxu0 0
    %180 = vmatpush1.bf16.msra.mxu0 0
    %181 = vmatprep.subr.bf16.mxu0 0
    %182 = vmatpush1.bf16.msra.mxu0 0
    %183 = vmatprep.subr.bf16.mxu0 0
    %184 = vmatpush1.bf16.msra.mxu0 0
    %185 = vmatprep.subr.bf16.mxu0 0
    %186 = vmatpush1.bf16.msra.mxu0 0
    %187 = vmatprep.subr.bf16.mxu0 0
    %188 = vmatpush1.bf16.msra.mxu0 0
    %189 = vmatprep.subr.bf16.mxu0 0
    %190 = vmatpush1.bf16.msra.mxu0 0
    %191 = vmatprep.subr.bf16.mxu0 0
    %192 = vmatpush1.bf16.msra.mxu0 0
    %193 = vmatprep.subr.bf16.mxu0 0
    %194 = vmatpush1.bf16.msra.mxu0 0
    %195 = vmatprep.mubr.bf16.mxu0 0
    %196 = vmatmul.mubr.bf16.gmra.mrb[0].mxu0 %v96
    %v197 = vpop.f32.mrb[0].mxu0
    %v198 = vadd.f32 0.0, %v197
    %v199 = vpop.f32.mrb[0].mxu0
    %v200 = vpop.f32.mrb[0].mxu0
    %v201 = vadd.f32 0.0, %v200
    %v202 = vpop.f32.mrb[0].mxu0
    %203 = vmatprep.mubr.bf16.mxu0 0
    %204 = vmatmul.mubr.bf16.gmra.mrb[0].mxu0 %v97
    %v205 = vpop.f32.mrb[0].mxu0
    %v206 = vadd.f32 0.0, %v205
    %v207 = vpop.f32.mrb[0].mxu0
    %v208 = vpop.f32.mrb[0].mxu0
    %v209 = vadd.f32 0.0, %v208
    %v210 = vpop.f32.mrb[0].mxu0
    %211 = vdwg.mxu0
    %v228 = vunpack.c.l.b16 %v59
    %v229 = vunpack.c.l.b16 %v60
    %v230 = vunpack.c.l.b16 %v61
    %v231 = vunpack.c.l.b16 %v62
    %v232 = vunpack.c.l.b16 %v63
    %v233 = vunpack.c.l.b16 %v64
    %v234 = vunpack.c.l.b16 %v65
    %v235 = vunpack.c.l.b16 %v66
    %v236 = vunpack.c.l.b16 %v67
    %v237 = vunpack.c.l.b16 %v68
    %v238 = vunpack.c.l.b16 %v69
    %v239 = vunpack.c.l.b16 %v70
    %v240 = vunpack.c.l.b16 %v71
    %v241 = vunpack.c.l.b16 %v72
    %v242 = vunpack.c.l.b16 %v73
    %v243 = vunpack.c.l.b16 %v74
    %v244 = vpack.c.b16 %v229, %v228
    %v245 = vpack.c.b16 %v231, %v230
    %v246 = vpack.c.b16 %v233, %v232
    %v247 = vpack.c.b16 %v235, %v234
    %v248 = vpack.c.b16 %v237, %v236
    %v249 = vpack.c.b16 %v239, %v238
    %v250 = vpack.c.b16 %v241, %v240
    %v251 = vpack.c.b16 %v243, %v242
    %260 = vmatprep.subr.bf16.mxu0 0
    %261 = vmatpush1.bf16.msra.mxu0 %v244
    %262 = vmatprep.subr.bf16.mxu0 0
    %263 = vmatpush1.bf16.msra.mxu0 %v245
    %264 = vmatprep.subr.bf16.mxu0 0
    %265 = vmatpush1.bf16.msra.mxu0 %v246
    %266 = vmatprep.subr.bf16.mxu0 0
    %267 = vmatpush1.bf16.msra.mxu0 %v247
    %268 = vmatprep.subr.bf16.mxu0 0
    %269 = vmatpush1.bf16.msra.mxu0 %v248
    %270 = vmatprep.subr.bf16.mxu0 0
    %271 = vmatpush1.bf16.msra.mxu0 %v249
    %272 = vmatprep.subr.bf16.mxu0 0
    %273 = vmatpush1.bf16.msra.mxu0 %v250
    %274 = vmatprep.subr.bf16.mxu0 0
    %275 = vmatpush1.bf16.msra.mxu0 %v251
    %276 = vmatprep.subr.bf16.mxu0 0
    %277 = vmatpush1.bf16.msra.mxu0 0
    %278 = vmatprep.subr.bf16.mxu0 0
    %279 = vmatpush1.bf16.msra.mxu0 0
    %280 = vmatprep.subr.bf16.mxu0 0
    %281 = vmatpush1.bf16.msra.mxu0 0
    %282 = vmatprep.subr.bf16.mxu0 0
    %283 = vmatpush1.bf16.msra.mxu0 0
    %284 = vmatprep.subr.bf16.mxu0 0
    %285 = vmatpush1.bf16.msra.mxu0 0
    %286 = vmatprep.subr.bf16.mxu0 0
    %287 = vmatpush1.bf16.msra.mxu0 0
    %288 = vmatprep.subr.bf16.mxu0 0
    %289 = vmatpush1.bf16.msra.mxu0 0
    %290 = vmatprep.subr.bf16.mxu0 0
    %291 = vmatpush1.bf16.msra.mxu0 0
    %292 = vmatprep.mubr.bf16.mxu0 0
    %293 = vmatmul.mubr.bf16.gmra.mrb[0].mxu0 %v57
    %v294 = vpop.f32.mrb[0].mxu0
    %v295 = vadd.f32 %v198, %v294
    %v296 = vpop.f32.mrb[0].mxu0
    %v297 = vpop.f32.mrb[0].mxu0
    %v298 = vadd.f32 %v201, %v297
    %v299 = vpop.f32.mrb[0].mxu0
    %300 = vmatprep.mubr.bf16.mxu0 0
    %301 = vmatmul.mubr.bf16.gmra.mrb[0].mxu0 %v58
    %v302 = vpop.f32.mrb[0].mxu0
    %v303 = vadd.f32 %v206, %v302
    %v304 = vpop.f32.mrb[0].mxu0
    %v305 = vpop.f32.mrb[0].mxu0
    %v306 = vadd.f32 %v209, %v305
    %v307 = vpop.f32.mrb[0].mxu0
    %308 = vdwg.mxu0
    %vm309 = vcmask 1045504
    %v310 = vrot.slane %v51, 2
    %v311 = vrot.slane %v52, 2
    %v312 = vsel %vm309, %v310, %v311
    %v313 = vrot.slane %v53, 2
    %v314 = vsel %vm309, %v311, %v313
    %v315 = vrot.slane %v54, 2
    %v316 = vrot.slane %v55, 2
    %v317 = vsel %vm309, %v315, %v316
    %v318 = vrot.slane %v56, 2
    %v319 = vsel %vm309, %v316, %v318
    %v324 = vpack.c.bf16 %v314, %v312
    %v325 = vpack.c.bf16 %v319, %v317
    %s326 = scalar_lea.vmem [#allocation5], 128
    %v327 = vld [vmem:[%s326] sm:$0xf]
    %v328 = vld [vmem:[%s326 + $0x4] sm:$0xf]
    %v329 = vld [vmem:[%s326 + $0x8] sm:$0xf]
    %v330 = vld [vmem:[%s326 + $0xc] sm:$0xf]
    %v331 = vld [vmem:[%s326 + $0x10] sm:$0xf]
    %v332 = vld [vmem:[%s326 + $0x14] sm:$0xf]
    %v333 = vld [vmem:[%s326 + $0x18] sm:$0xf]
    %v334 = vld [vmem:[%s326 + $0x1c] sm:$0xf]
    %v335 = vld [vmem:[%s326 + $0x20] sm:$0xf]
    %v336 = vld [vmem:[%s326 + $0x24] sm:$0xf]
    %v337 = vld [vmem:[%s326 + $0x28] sm:$0xf]
    %v338 = vld [vmem:[%s326 + $0x2c] sm:$0xf]
    %v339 = vld [vmem:[%s326 + $0x30] sm:$0xf]
    %v340 = vld [vmem:[%s326 + $0x34] sm:$0xf]
    %v341 = vld [vmem:[%s326 + $0x38] sm:$0xf]
    %v342 = vld [vmem:[%s326 + $0x3c] sm:$0xf]
    %v359 = vunpack.c.l.b16 %v327
    %v360 = vunpack.c.l.b16 %v328
    %v361 = vunpack.c.l.b16 %v329
    %v362 = vunpack.c.l.b16 %v330
    %v363 = vunpack.c.l.b16 %v331
    %v364 = vunpack.c.l.b16 %v332
    %v365 = vunpack.c.l.b16 %v333
    %v366 = vunpack.c.l.b16 %v334
    %v367 = vunpack.c.l.b16 %v335
    %v368 = vunpack.c.l.b16 %v336
    %v369 = vunpack.c.l.b16 %v337
    %v370 = vunpack.c.l.b16 %v338
    %v371 = vunpack.c.l.b16 %v339
    %v372 = vunpack.c.l.b16 %v340
    %v373 = vunpack.c.l.b16 %v341
    %v374 = vunpack.c.l.b16 %v342
    %v375 = vpack.c.b16 %v360, %v359
    %v376 = vpack.c.b16 %v362, %v361
    %v377 = vpack.c.b16 %v364, %v363
    %v378 = vpack.c.b16 %v366, %v365
    %v379 = vpack.c.b16 %v368, %v367
    %v380 = vpack.c.b16 %v370, %v369
    %v381 = vpack.c.b16 %v372, %v371
    %v382 = vpack.c.b16 %v374, %v373
    %391 = vmatprep.subr.bf16.mxu0 0
    %392 = vmatpush1.bf16.msra.mxu0 %v375
    %393 = vmatprep.subr.bf16.mxu0 0
    %394 = vmatpush1.bf16.msra.mxu0 %v376
    %395 = vmatprep.subr.bf16.mxu0 0
    %396 = vmatpush1.bf16.msra.mxu0 %v377
    %397 = vmatprep.subr.bf16.mxu0 0
    %398 = vmatpush1.bf16.msra.mxu0 %v378
    %399 = vmatprep.subr.bf16.mxu0 0
    %400 = vmatpush1.bf16.msra.mxu0 %v379
    %401 = vmatprep.subr.bf16.mxu0 0
    %402 = vmatpush1.bf16.msra.mxu0 %v380
    %403 = vmatprep.subr.bf16.mxu0 0
    %404 = vmatpush1.bf16.msra.mxu0 %v381
    %405 = vmatprep.subr.bf16.mxu0 0
    %406 = vmatpush1.bf16.msra.mxu0 %v382
    %407 = vmatprep.subr.bf16.mxu0 0
    %408 = vmatpush1.bf16.msra.mxu0 0
    %409 = vmatprep.subr.bf16.mxu0 0
    %410 = vmatpush1.bf16.msra.mxu0 0
    %411 = vmatprep.subr.bf16.mxu0 0
    %412 = vmatpush1.bf16.msra.mxu0 0
    %413 = vmatprep.subr.bf16.mxu0 0
    %414 = vmatpush1.bf16.msra.mxu0 0
    %415 = vmatprep.subr.bf16.mxu0 0
    %416 = vmatpush1.bf16.msra.mxu0 0
    %417 = vmatprep.subr.bf16.mxu0 0
    %418 = vmatpush1.bf16.msra.mxu0 0
    %419 = vmatprep.subr.bf16.mxu0 0
    %420 = vmatpush1.bf16.msra.mxu0 0
    %421 = vmatprep.subr.bf16.mxu0 0
    %422 = vmatpush1.bf16.msra.mxu0 0
    %423 = vmatprep.mubr.bf16.mxu0 0
    %424 = vmatmul.mubr.bf16.gmra.mrb[0].mxu0 %v324
    %v425 = vpop.f32.mrb[0].mxu0
    %v426 = vadd.f32 0.0, %v425
    %v427 = vpop.f32.mrb[0].mxu0
    %v428 = vpop.f32.mrb[0].mxu0
    %v429 = vadd.f32 0.0, %v428
    %v430 = vpop.f32.mrb[0].mxu0
    %431 = vmatprep.mubr.bf16.mxu0 0
    %432 = vmatmul.mubr.bf16.gmra.mrb[0].mxu0 %v325
    %v433 = vpop.f32.mrb[0].mxu0
    %v434 = vadd.f32 0.0, %v433
    %v435 = vpop.f32.mrb[0].mxu0
    %v436 = vpop.f32.mrb[0].mxu0
    %v437 = vadd.f32 0.0, %v436
    %v438 = vpop.f32.mrb[0].mxu0
    %439 = vdwg.mxu0
    %v440 = vadd.f32 %v295, %v426
    %v441 = vadd.f32 %v298, %v429
    %v442 = vadd.f32 %v303, %v434
    %v443 = vadd.f32 %v306, %v437
    %v444 = vld [vmem:[%s2] sm:$0x1]
    %v445 = vld [vmem:[%s3] sm:$0x1]
    %v446 = vadd.f32 %v440, %v441
    %v447 = vadd.f32 %v446, %v442
    %v448 = vadd.f32 %v447, %v443
    %v449 = vrot.slane %v448, 4
    %v450 = vadd.f32 %v448, %v449
    %v451 = vrot.slane %v450, 2
    %v452 = vadd.f32 %v450, %v451
    %v453 = vrot.slane %v452, 1
    %v454 = vadd.f32 %v452, %v453
    %455 = vrot.lane.b32.xlu0 %v454, 8
    %v456 = vpop.permute.xlu0 %455
    %v457 = vadd.f32 %v454, %v456
    %458 = vrot.lane.b32.xlu0 %v457, 16
    %v459 = vpop.permute.xlu0 %458
    %v460 = vadd.f32 %v457, %v459
    %461 = vrot.lane.b32.xlu0 %v460, 32
    %v462 = vpop.permute.xlu0 %461
    %v463 = vadd.f32 %v460, %v462
    %464 = vrot.lane.b32.xlu0 %v463, 64
    %v465 = vpop.permute.xlu0 %464
    %v466 = vadd.f32 %v463, %v465
    %v467 = vmul.f32 %v466, 0.001953125
    %v468 = vlaneseq
    %v469 = vshrl.u32 %v468, 7
    %v470 = vsub.s32 0, %v469
    %v471 = vrot.slane %v467, %v470
    %v472 = vsub.f32 %v440, %v471
    %v473 = vsub.f32 %v441, %v471
    %v474 = vsub.f32 %v442, %v471
    %v475 = vsub.f32 %v443, %v471
    %v476 = vmul.f32 %v472, %v472
    %v477 = vmul.f32 %v473, %v473
    %v478 = vmul.f32 %v474, %v474
    %v479 = vmul.f32 %v475, %v475
    %v480 = vadd.f32 %v476, %v477
    %v481 = vadd.f32 %v480, %v478
    %v482 = vadd.f32 %v481, %v479
    %v483 = vrot.slane %v482, 4
    %v484 = vadd.f32 %v482, %v483
    %v485 = vrot.slane %v484, 2
    %v486 = vadd.f32 %v484, %v485
    %v487 = vrot.slane %v486, 1
    %v488 = vadd.f32 %v486, %v487
    %489 = vrot.lane.b32.xlu0 %v488, 8
    %v490 = vpop.permute.xlu0 %489
    %v491 = vadd.f32 %v488, %v490
    %492 = vrot.lane.b32.xlu0 %v491, 16
    %v493 = vpop.permute.xlu0 %492
    %v494 = vadd.f32 %v491, %v493
    %495 = vrot.lane.b32.xlu0 %v494, 32
    %v496 = vpop.permute.xlu0 %495
    %v497 = vadd.f32 %v494, %v496
    %498 = vrot.lane.b32.xlu0 %v497, 64
    %v499 = vpop.permute.xlu0 %498
    %v500 = vadd.f32 %v497, %v499
    %v501 = vmul.f32 %v500, 0.001953125
    %v502 = vadd.f32 %v501, 1e-05
    %v503 = vrsqrt.pop %v502
    %v504 = vmul.f32 %v444, %v503
    %v505 = vmul.f32 %v467, %v504
    %v506 = vsub.f32 %v445, %v505
    %v508 = vlaneseq
    %v509 = vshrl.u32 %v508, 7
    %v510 = vsub.s32 0, %v509
    %v511 = vrot.slane %v504, %v510
    %v513 = vmul.f32 %v440, %v511
    %v514 = vmul.f32 %v441, %v511
    %v515 = vmul.f32 %v442, %v511
    %v516 = vmul.f32 %v443, %v511
    %v518 = vlaneseq
    %v519 = vshrl.u32 %v518, 7
    %v520 = vsub.s32 0, %v519
    %v521 = vrot.slane %v506, %v520
    %v523 = vadd.f32 %v513, %v521
    %v524 = vadd.f32 %v514, %v521
    %v525 = vadd.f32 %v515, %v521
    %v526 = vadd.f32 %v516, %v521
    %v527 = vmax.f32 %v523, 0.0
    %v528 = vmax.f32 %v524, 0.0
    %v529 = vmax.f32 %v525, 0.0
    %v530 = vmax.f32 %v526, 0.0
    %531 = vst [vmem:[#allocation2] sm:$0x1] 0.0
    %532 = vst [vmem:[#allocation2 + $0x18] sm:$0x1] 0.0
    %533 = vst [vmem:[#allocation2 + $0x11] sm:$0x1] 0.0
    %534 = vst [vmem:[#allocation2 + $0x29] sm:$0x1] 0.0
    %535 = vst [vmem:[#allocation2 + $0x1] sm:$0xff] %v527
    %536 = vst [vmem:[#allocation2 + $0x9] sm:$0xff] %v528
    %537 = vst [vmem:[#allocation2 + $0x19] sm:$0xff] %v529
    %538 = vst [vmem:[#allocation2 + $0x21] sm:$0xff] %v530
    %s539 = smul.u32 4, 3
    %s540 = smul.u32 %s539, 16
    %s541 = smul.u32 %s540, 1
    %s542 = sshll.u32 %s541, 4
    %543 = dma.done [#allocation4], %s542
    %v544 = vld [vmem:[#allocation2] sm:$0xff]
    %v545 = vld [vmem:[#allocation2 + $0x8] sm:$0xff]
    %v546 = vld [vmem:[#allocation2 + $0x10] sm:$0x3]
    %v547 = vld [vmem:[#allocation2 + $0x18] sm:$0xff]
    %v548 = vld [vmem:[#allocation2 + $0x20] sm:$0xff]
    %v549 = vld [vmem:[#allocation2 + $0x28] sm:$0x3]
    %v550 = vpack.c.bf16 %v545, %v544
    %v551 = vpack.c.bf16 %v548, %v547
    %v552 = vld [vmem:[#allocation3] sm:$0xff]
    %v553 = vld [vmem:[#allocation3 + $0x8] sm:$0xff]
    %v554 = vld [vmem:[#allocation3 + $0x10] sm:$0xff]
    %v555 = vld [vmem:[#allocation3 + $0x18] sm:$0xff]
    %v556 = vld [vmem:[#allocation3 + $0x20] sm:$0xff]
    %v557 = vld [vmem:[#allocation3 + $0x28] sm:$0xff]
    %v558 = vld [vmem:[#allocation3 + $0x30] sm:$0xff]
    %v559 = vld [vmem:[#allocation3 + $0x38] sm:$0xff]
    %v566 = vrot.slane %v544, 1
    %v567 = vrot.slane %v545, 1
    %v568 = vsel %vm81, %v566, %v567
    %v569 = vrot.slane %v546, 1
    %v570 = vsel %vm81, %v567, %v569
    %v571 = vrot.slane %v547, 1
    %v572 = vrot.slane %v548, 1
    %v573 = vsel %vm81, %v571, %v572
    %v574 = vrot.slane %v549, 1
    %v575 = vsel %vm81, %v572, %v574
    %v580 = vpack.c.bf16 %v570, %v568
    %v581 = vpack.c.bf16 %v575, %v573
    %s582 = scalar_lea.vmem [#allocation3], 64
    %v583 = vld [vmem:[%s582] sm:$0xff]
    %v584 = vld [vmem:[%s582 + $0x8] sm:$0xff]
    %v585 = vld [vmem:[%s582 + $0x10] sm:$0xff]
    %v586 = vld [vmem:[%s582 + $0x18] sm:$0xff]
    %v587 = vld [vmem:[%s582 + $0x20] sm:$0xff]
    %v588 = vld [vmem:[%s582 + $0x28] sm:$0xff]
    %v589 = vld [vmem:[%s582 + $0x30] sm:$0xff]
    %v590 = vld [vmem:[%s582 + $0x38] sm:$0xff]
    %591 = vmatprep.subr.bf16.mxu0 0
    %592 = vmatpush1.bf16.msra.mxu0 %v583
    %593 = vmatprep.subr.bf16.mxu0 0
    %594 = vmatpush1.bf16.msra.mxu0 %v584
    %595 = vmatprep.subr.bf16.mxu0 0
    %596 = vmatpush1.bf16.msra.mxu0 %v585
    %597 = vmatprep.subr.bf16.mxu0 0
    %598 = vmatpush1.bf16.msra.mxu0 %v586
    %599 = vmatprep.subr.bf16.mxu0 0
    %600 = vmatpush1.bf16.msra.mxu0 %v587
    %601 = vmatprep.subr.bf16.mxu0 0
    %602 = vmatpush1.bf16.msra.mxu0 %v588
    %603 = vmatprep.subr.bf16.mxu0 0
    %604 = vmatpush1.bf16.msra.mxu0 %v589
    %605 = vmatprep.subr.bf16.mxu0 0
    %606 = vmatpush1.bf16.msra.mxu0 %v590
    %607 = vmatprep.subr.bf16.mxu0 0
    %608 = vmatpush1.bf16.msra.mxu0 0
    %609 = vmatprep.subr.bf16.mxu0 0
    %610 = vmatpush1.bf16.msra.mxu0 0
    %611 = vmatprep.subr.bf16.mxu0 0
    %612 = vmatpush1.bf16.msra.mxu0 0
    %613 = vmatprep.subr.bf16.mxu0 0
    %614 = vmatpush1.bf16.msra.mxu0 0
    %615 = vmatprep.subr.bf16.mxu0 0
    %616 = vmatpush1.bf16.msra.mxu0 0
    %617 = vmatprep.subr.bf16.mxu0 0
    %618 = vmatpush1.bf16.msra.mxu0 0
    %619 = vmatprep.subr.bf16.mxu0 0
    %620 = vmatpush1.bf16.msra.mxu0 0
    %621 = vmatprep.subr.bf16.mxu0 0
    %622 = vmatpush1.bf16.msra.mxu0 0
    %623 = vmatprep.mubr.bf16.mxu0 0
    %624 = vmatmul.mubr.bf16.gmra.mrb[0].mxu0 %v580
    %v625 = vpop.f32.mrb[0].mxu0
    %v626 = vadd.f32 0.0, %v625
    %v627 = vpop.f32.mrb[0].mxu0
    %v628 = vpop.f32.mrb[0].mxu0
    %v629 = vadd.f32 0.0, %v628
    %v630 = vpop.f32.mrb[0].mxu0
    %631 = vmatprep.mubr.bf16.mxu0 0
    %632 = vmatmul.mubr.bf16.gmra.mrb[0].mxu0 %v581
    %v633 = vpop.f32.mrb[0].mxu0
    %v634 = vadd.f32 0.0, %v633
    %v635 = vpop.f32.mrb[0].mxu0
    %v636 = vpop.f32.mrb[0].mxu0
    %v637 = vadd.f32 0.0, %v636
    %v638 = vpop.f32.mrb[0].mxu0
    %639 = vdwg.mxu0
    %640 = vmatprep.subr.bf16.mxu0 0
    %641 = vmatpush1.bf16.msra.mxu0 %v552
    %642 = vmatprep.subr.bf16.mxu0 0
    %643 = vmatpush1.bf16.msra.mxu0 %v553
    %644 = vmatprep.subr.bf16.mxu0 0
    %645 = vmatpush1.bf16.msra.mxu0 %v554
    %646 = vmatprep.subr.bf16.mxu0 0
    %647 = vmatpush1.bf16.msra.mxu0 %v555
    %648 = vmatprep.subr.bf16.mxu0 0
    %649 = vmatpush1.bf16.msra.mxu0 %v556
    %650 = vmatprep.subr.bf16.mxu0 0
    %651 = vmatpush1.bf16.msra.mxu0 %v557
    %652 = vmatprep.subr.bf16.mxu0 0
    %653 = vmatpush1.bf16.msra.mxu0 %v558
    %654 = vmatprep.subr.bf16.mxu0 0
    %655 = vmatpush1.bf16.msra.mxu0 %v559
    %656 = vmatprep.subr.bf16.mxu0 0
    %657 = vmatpush1.bf16.msra.mxu0 0
    %658 = vmatprep.subr.bf16.mxu0 0
    %659 = vmatpush1.bf16.msra.mxu0 0
    %660 = vmatprep.subr.bf16.mxu0 0
    %661 = vmatpush1.bf16.msra.mxu0 0
    %662 = vmatprep.subr.bf16.mxu0 0
    %663 = vmatpush1.bf16.msra.mxu0 0
    %664 = vmatprep.subr.bf16.mxu0 0
    %665 = vmatpush1.bf16.msra.mxu0 0
    %666 = vmatprep.subr.bf16.mxu0 0
    %667 = vmatpush1.bf16.msra.mxu0 0
    %668 = vmatprep.subr.bf16.mxu0 0
    %669 = vmatpush1.bf16.msra.mxu0 0
    %670 = vmatprep.subr.bf16.mxu0 0
    %671 = vmatpush1.bf16.msra.mxu0 0
    %672 = vmatprep.mubr.bf16.mxu0 0
    %673 = vmatmul.mubr.bf16.gmra.mrb[0].mxu0 %v550
    %v674 = vpop.f32.mrb[0].mxu0
    %v675 = vadd.f32 %v626, %v674
    %v676 = vpop.f32.mrb[0].mxu0
    %v677 = vpop.f32.mrb[0].mxu0
    %v678 = vadd.f32 %v629, %v677
    %v679 = vpop.f32.mrb[0].mxu0
    %680 = vmatprep.mubr.bf16.mxu0 0
    %681 = vmatmul.mubr.bf16.gmra.mrb[0].mxu0 %v551
    %v682 = vpop.f32.mrb[0].mxu0
    %v683 = vadd.f32 %v634, %v682
    %v684 = vpop.f32.mrb[0].mxu0
    %v685 = vpop.f32.mrb[0].mxu0
    %v686 = vadd.f32 %v637, %v685
    %v687 = vpop.f32.mrb[0].mxu0
    %688 = vdwg.mxu0
    %v689 = vrot.slane %v544, 2
    %v690 = vrot.slane %v545, 2
    %v691 = vsel %vm309, %v689, %v690
    %v692 = vrot.slane %v546, 2
    %v693 = vsel %vm309, %v690, %v692
    %v694 = vrot.slane %v547, 2
    %v695 = vrot.slane %v548, 2
    %v696 = vsel %vm309, %v694, %v695
    %v697 = vrot.slane %v549, 2
    %v698 = vsel %vm309, %v695, %v697
    %v703 = vpack.c.bf16 %v693, %v691
    %v704 = vpack.c.bf16 %v698, %v696
    %s705 = scalar_lea.vmem [#allocation3], 128
    %v706 = vld [vmem:[%s705] sm:$0xff]
    %v707 = vld [vmem:[%s705 + $0x8] sm:$0xff]
    %v708 = vld [vmem:[%s705 + $0x10] sm:$0xff]
    %v709 = vld [vmem:[%s705 + $0x18] sm:$0xff]
    %v710 = vld [vmem:[%s705 + $0x20] sm:$0xff]
    %v711 = vld [vmem:[%s705 + $0x28] sm:$0xff]
    %v712 = vld [vmem:[%s705 + $0x30] sm:$0xff]
    %v713 = vld [vmem:[%s705 + $0x38] sm:$0xff]
    %714 = vmatprep.subr.bf16.mxu0 0
    %715 = vmatpush1.bf16.msra.mxu0 %v706
    %716 = vmatprep.subr.bf16.mxu0 0
    %717 = vmatpush1.bf16.msra.mxu0 %v707
    %718 = vmatprep.subr.bf16.mxu0 0
    %719 = vmatpush1.bf16.msra.mxu0 %v708
    %720 = vmatprep.subr.bf16.mxu0 0
    %721 = vmatpush1.bf16.msra.mxu0 %v709
    %722 = vmatprep.subr.bf16.mxu0 0
    %723 = vmatpush1.bf16.msra.mxu0 %v710
    %724 = vmatprep.subr.bf16.mxu0 0
    %725 = vmatpush1.bf16.msra.mxu0 %v711
    %726 = vmatprep.subr.bf16.mxu0 0
    %727 = vmatpush1.bf16.msra.mxu0 %v712
    %728 = vmatprep.subr.bf16.mxu0 0
    %729 = vmatpush1.bf16.msra.mxu0 %v713
    %730 = vmatprep.subr.bf16.mxu0 0
    %731 = vmatpush1.bf16.msra.mxu0 0
    %732 = vmatprep.subr.bf16.mxu0 0
    %733 = vmatpush1.bf16.msra.mxu0 0
    %734 = vmatprep.subr.bf16.mxu0 0
    %735 = vmatpush1.bf16.msra.mxu0 0
    %736 = vmatprep.subr.bf16.mxu0 0
    %737 = vmatpush1.bf16.msra.mxu0 0
    %738 = vmatprep.subr.bf16.mxu0 0
    %739 = vmatpush1.bf16.msra.mxu0 0
    %740 = vmatprep.subr.bf16.mxu0 0
    %741 = vmatpush1.bf16.msra.mxu0 0
    %742 = vmatprep.subr.bf16.mxu0 0
    %743 = vmatpush1.bf16.msra.mxu0 0
    %744 = vmatprep.subr.bf16.mxu0 0
    %745 = vmatpush1.bf16.msra.mxu0 0
    %746 = vmatprep.mubr.bf16.mxu0 0
    %747 = vmatmul.mubr.bf16.gmra.mrb[0].mxu0 %v703
    %v748 = vpop.f32.mrb[0].mxu0
    %v749 = vadd.f32 0.0, %v748
    %v750 = vpop.f32.mrb[0].mxu0
    %v751 = vpop.f32.mrb[0].mxu0
    %v752 = vadd.f32 0.0, %v751
    %v753 = vpop.f32.mrb[0].mxu0
    %754 = vmatprep.mubr.bf16.mxu0 0
    %755 = vmatmul.mubr.bf16.gmra.mrb[0].mxu0 %v704
    %v756 = vpop.f32.mrb[0].mxu0
    %v757 = vadd.f32 0.0, %v756
    %v758 = vpop.f32.mrb[0].mxu0
    %v759 = vpop.f32.mrb[0].mxu0
    %v760 = vadd.f32 0.0, %v759
    %v761 = vpop.f32.mrb[0].mxu0
    %762 = vdwg.mxu0
    %v763 = vadd.f32 %v675, %v749
    %v764 = vadd.f32 %v678, %v752
    %v765 = vadd.f32 %v683, %v757
    %v766 = vadd.f32 %v686, %v760
    %v767 = vld [vmem:[%s5] sm:$0x1]
    %v768 = vld [vmem:[%s6] sm:$0x1]
    %v769 = vadd.f32 %v763, %v764
    %v770 = vadd.f32 %v769, %v765
    %v771 = vadd.f32 %v770, %v766
    %v772 = vrot.slane %v771, 4
    %v773 = vadd.f32 %v771, %v772
    %v774 = vrot.slane %v773, 2
    %v775 = vadd.f32 %v773, %v774
    %v776 = vrot.slane %v775, 1
    %v777 = vadd.f32 %v775, %v776
    %778 = vrot.lane.b32.xlu0 %v777, 8
    %v779 = vpop.permute.xlu0 %778
    %v780 = vadd.f32 %v777, %v779
    %781 = vrot.lane.b32.xlu0 %v780, 16
    %v782 = vpop.permute.xlu0 %781
    %v783 = vadd.f32 %v780, %v782
    %784 = vrot.lane.b32.xlu0 %v783, 32
    %v785 = vpop.permute.xlu0 %784
    %v786 = vadd.f32 %v783, %v785
    %787 = vrot.lane.b32.xlu0 %v786, 64
    %v788 = vpop.permute.xlu0 %787
    %v789 = vadd.f32 %v786, %v788
    %v790 = vmul.f32 %v789, 0.001953125
    %v791 = vlaneseq
    %v792 = vshrl.u32 %v791, 7
    %v793 = vsub.s32 0, %v792
    %v794 = vrot.slane %v790, %v793
    %v795 = vsub.f32 %v763, %v794
    %v796 = vsub.f32 %v764, %v794
    %v797 = vsub.f32 %v765, %v794
    %v798 = vsub.f32 %v766, %v794
    %v799 = vmul.f32 %v795, %v795
    %v800 = vmul.f32 %v796, %v796
    %v801 = vmul.f32 %v797, %v797
    %v802 = vmul.f32 %v798, %v798
    %v803 = vadd.f32 %v799, %v800
    %v804 = vadd.f32 %v803, %v801
    %v805 = vadd.f32 %v804, %v802
    %v806 = vrot.slane %v805, 4
    %v807 = vadd.f32 %v805, %v806
    %v808 = vrot.slane %v807, 2
    %v809 = vadd.f32 %v807, %v808
    %v810 = vrot.slane %v809, 1
    %v811 = vadd.f32 %v809, %v810
    %812 = vrot.lane.b32.xlu0 %v811, 8
    %v813 = vpop.permute.xlu0 %812
    %v814 = vadd.f32 %v811, %v813
    %815 = vrot.lane.b32.xlu0 %v814, 16
    %v816 = vpop.permute.xlu0 %815
    %v817 = vadd.f32 %v814, %v816
    %818 = vrot.lane.b32.xlu0 %v817, 32
    %v819 = vpop.permute.xlu0 %818
    %v820 = vadd.f32 %v817, %v819
    %821 = vrot.lane.b32.xlu0 %v820, 64
    %v822 = vpop.permute.xlu0 %821
    %v823 = vadd.f32 %v820, %v822
    %v824 = vmul.f32 %v823, 0.001953125
    %v825 = vadd.f32 %v824, 1e-05
    %v826 = vrsqrt.pop %v825
    %v827 = vmul.f32 %v767, %v826
    %v828 = vmul.f32 %v790, %v827
    %v829 = vsub.f32 %v768, %v828
    %v831 = vlaneseq
    %v832 = vshrl.u32 %v831, 7
    %v833 = vsub.s32 0, %v832
    %v834 = vrot.slane %v827, %v833
    %v836 = vmul.f32 %v763, %v834
    %v837 = vmul.f32 %v764, %v834
    %v838 = vmul.f32 %v765, %v834
    %v839 = vmul.f32 %v766, %v834
    %v841 = vlaneseq
    %v842 = vshrl.u32 %v841, 7
    %v843 = vsub.s32 0, %v842
    %v844 = vrot.slane %v829, %v843
    %v846 = vadd.f32 %v836, %v844
    %v847 = vadd.f32 %v837, %v844
    %v848 = vadd.f32 %v838, %v844
    %v849 = vadd.f32 %v839, %v844
    %v850 = vadd.f32 %v846, %v84
    %v851 = vadd.f32 %v847, %v86
    %v852 = vadd.f32 %v848, %v89
    %v853 = vadd.f32 %v849, %v91
    %v854 = vmax.f32 %v850, 0.0
    %v855 = vmax.f32 %v851, 0.0
    %v856 = vmax.f32 %v852, 0.0
    %v857 = vmax.f32 %v853, 0.0
    %858 = vst [vmem:[#allocation8] sm:$0xff] %v854
    %859 = vst [vmem:[#allocation8 + $0x8] sm:$0xff] %v855
    %860 = vst [vmem:[#allocation8 + $0x10] sm:$0xff] %v856
    %861 = vst [vmem:[#allocation8 + $0x18] sm:$0xff] %v857
    // Predicated region
    $region34: #{tpu_custom_call.1} parent=1 // pred_check
      _
    $region35: #{tpu_custom_call.1} parent=1 // pred_check_branch
      %863 = sbr.rel (0) target = $region37
    $region36: #{tpu_custom_call.1} parent=1 // pred_region
      %s865 = ssub.s32 512, 512
      %866 = vsyncadd [#allocation7], %s865
      %s867 = sshll.u32 [#allocation8], 4
      %s868 = int_to_ptr.vmem [resolvable:$true] %s867
      %873 = dma.vmem_to_hbm [thread:$0]  %s868, 512, %s7, [#allocation7], 128, 128, 8
    $region37: #{tpu_custom_call.1} parent=1 // pred_fallthru
      _
    // Predicated region
    $region38: #{tpu_custom_call.1} parent=1 // pred_check
      _
    $region39: #{tpu_custom_call.1} parent=1 // pred_check_branch
      %875 = sbr.rel (0) target = $region41
    $region40: #{tpu_custom_call.1} parent=1 // pred_region
      %876 = dma.done [#allocation7], 512
    $region41: #{tpu_custom_call.1} parent=1 // pred_fallthru
      _
    %877 = vsyncpa [#allocation6], 1
    %878 = vsyncpa [#allocation7], 1
  %879 = vsyncmov [#allocation4]
  %s880 = vpop.sfrf %879
  %p881 = scmp.eq.s32.totalorder %s880, 0
  %p882 = pneg %p881
  %884 = shalt.err (%p882)

</llo_original>
